<compile_context>
chip_gen: v7x
topology: tpu7x:2x2x1
jax: 0.10.0
libtpu: 0.0.40
codegen_flags: <defaults>
</compile_context>

<pallas_src>
import jax
import jax.numpy as jnp
from jax.experimental import pallas as pl
from jax.experimental.pallas import tpu as pltpu


def _sure_fc_kernel(x_ref, w_ref, g_ref, b_ref, o_ref):
    # Single MXU matmul, f32 accumulation.
    h = jnp.dot(x_ref[...], w_ref[...], preferred_element_type=jnp.float32)

    n = h.shape[0]
    inv_n = jnp.float32(1.0 / n)

    # BatchNorm1d, training-mode statistics over the batch axis.
    # Two *independent* sublane reductions (no mean->var serialization).
    s1 = jnp.sum(h, axis=0, keepdims=True)        # [1, D2]  sum(h)
    s2 = jnp.sum(h * h, axis=0, keepdims=True)    # [1, D2]  sum(h^2)
    mean = s1 * inv_n
    var = jnp.maximum(s2 * inv_n - mean * mean, 0.0)   # biased var, clamped

    # Fold BN affine into one FMA over the [N, D2] tile.
    # (Linear bias omitted: exactly removed by the mean subtraction.)
    scale = g_ref[...] * jax.lax.rsqrt(var + 1e-5)     # [1, D2]
    shift = b_ref[...] - mean * scale                  # [1, D2]
    h_bn = h * scale + shift

    # ReLU
    h_relu = jnp.maximum(h_bn, 0.0)

    # F.normalize(dim=1): x / max(||x||_2, 1e-12)
    # == x * rsqrt(max(sum(x^2), 1e-24))  -> one EUP rsqrt, no divide.
    ssq = jnp.sum(h_relu * h_relu, axis=1, keepdims=True)   # [N, 1]
    out = h_relu * jax.lax.rsqrt(jnp.maximum(ssq, 1e-24))

    o_ref[...] = out.astype(o_ref.dtype)


@jax.jit
def sure_fc_caltech(x, w, b, gamma, beta):
    """x: [N, D1], w: [D1, D2] (Linear weight transposed), b/gamma/beta: [D2].

    Returns [N, D2].  `b` is accepted for API fidelity with nn.Linear but is a
    mathematical no-op under training-mode BatchNorm, so it is not passed to
    the kernel.
    """
    n, d1 = x.shape
    d2 = w.shape[1]
    del b  # bias cancelled by BN mean subtraction (training-mode BN)

    gamma2 = gamma.reshape(1, d2)
    beta2 = beta.reshape(1, d2)

    cost = pl.CostEstimate(
        flops=2 * n * d1 * d2,
        transcendentals=d2 + n,                            # BN rsqrt + L2 rsqrt
        bytes_accessed=4 * (n * d1 + d1 * d2 + 2 * d2 + n * d2),
    )

    return pl.pallas_call(
        _sure_fc_kernel,
        out_shape=jax.ShapeDtypeStruct((n, d2), x.dtype),
        in_specs=[
            pl.BlockSpec(memory_space=pltpu.MemorySpace.VMEM),  # X     [N, D1]
            pl.BlockSpec(memory_space=pltpu.MemorySpace.VMEM),  # W     [D1, D2]
            pl.BlockSpec(memory_space=pltpu.MemorySpace.VMEM),  # gamma [1, D2]
            pl.BlockSpec(memory_space=pltpu.MemorySpace.VMEM),  # beta  [1, D2]
        ],
        out_specs=pl.BlockSpec(memory_space=pltpu.MemorySpace.VMEM),
        cost_estimate=cost,
    )(x, w, gamma2, beta2)


def _reference(x, w, b, gamma, beta):
    h = x @ w + b[None, :]
    mean = jnp.mean(h, axis=0, keepdims=True)
    var = jnp.mean((h - mean) ** 2, axis=0, keepdims=True)
    h = (h - mean) * jax.lax.rsqrt(var + 1e-5) * gamma[None, :] + beta[None, :]
    h = jnp.maximum(h, 0.0)
    norm = jnp.sqrt(jnp.sum(h * h, axis=1, keepdims=True))
    return h / jnp.maximum(norm, 1e-12)


if __name__ == "__main__":
    # Small shapes consistent with the FC module: batch=16, node_dim1=256,
    # node_dim2=128.
    N, D1, D2 = 16, 256, 128

    key = jax.random.PRNGKey(0)
    kx, kw, kb, kg, kbe = jax.random.split(key, 5)

    x = jax.random.normal(kx, (N, D1), dtype=jnp.float32)
    # Linear weight stored transposed: [D1, D2].
    w = jax.random.normal(kw, (D1, D2), dtype=jnp.float32) * (1.0 / jnp.sqrt(D1))
    b = jax.random.normal(kb, (D2,), dtype=jnp.float32) * 0.1
    gamma = 1.0 + 0.1 * jax.random.normal(kg, (D2,), dtype=jnp.float32)
    beta = 0.1 * jax.random.normal(kbe, (D2,), dtype=jnp.float32)

    out = sure_fc_caltech(x, w, b, gamma, beta)
    out = jax.block_until_ready(out)

    ref = _reference(x, w, b, gamma, beta)
    assert out.shape == (N, D2)
    assert jnp.allclose(out, ref, atol=1e-5, rtol=1e-5), "mismatch vs reference"

    print("KERNEL_OK")
</pallas_src>

<mosaic_0001>
module attributes {stable_mosaic.version = 11 : i64} {
  func.func @_sure_fc_kernel(%arg0: memref<16x256xf32, #tpu.memory_space<vmem>>, %arg1: memref<256x128xf32, #tpu.memory_space<vmem>>, %arg2: memref<1x128xf32, #tpu.memory_space<vmem>>, %arg3: memref<1x128xf32, #tpu.memory_space<vmem>>, %arg4: memref<16x128xf32, #tpu.memory_space<vmem>>) attributes {dimension_semantics = [], scalar_prefetch = 0 : i64, scratch_operands = 0 : i64, tpu.core_type = #tpu.core_type<tc>} {
    %c0 = arith.constant 0 : index
    %c0_0 = arith.constant 0 : index
    %0 = vector.load %arg0[%c0, %c0_0] : memref<16x256xf32, #tpu.memory_space<vmem>>, vector<16x256xf32>
    %c0_1 = arith.constant 0 : index
    %c0_2 = arith.constant 0 : index
    %1 = vector.load %arg1[%c0_1, %c0_2] : memref<256x128xf32, #tpu.memory_space<vmem>>, vector<256x128xf32>
    %cst = arith.constant dense<0.000000e+00> : vector<16x128xf32>
    %2 = tpu.matmul %0, %1, %cst {dimension_numbers = #tpu.dot_dimension_numbers<[1], [0], [0], [1], [0, 0, 1, 1], [], []>} : vector<16x256xf32>, vector<256x128xf32>, vector<16x128xf32> -> vector<16x128xf32>
    %cst_3 = arith.constant dense<0.000000e+00> : vector<128xf32>
    %3 = vector.multi_reduction <add>, %2, %cst_3 [0] : vector<16x128xf32> to vector<128xf32>
    %4 = vector.shape_cast %3 : vector<128xf32> to vector<1x128xf32>
    %5 = arith.mulf %2, %2 : vector<16x128xf32>
    %cst_4 = arith.constant dense<0.000000e+00> : vector<128xf32>
    %6 = vector.multi_reduction <add>, %5, %cst_4 [0] : vector<16x128xf32> to vector<128xf32>
    %7 = vector.shape_cast %6 : vector<128xf32> to vector<1x128xf32>
    %cst_5 = arith.constant 6.250000e-02 : f32
    %8 = vector.broadcast %cst_5 : f32 to vector<1x128xf32>
    %9 = arith.mulf %4, %8 : vector<1x128xf32>
    %cst_6 = arith.constant 6.250000e-02 : f32
    %10 = vector.broadcast %cst_6 : f32 to vector<1x128xf32>
    %11 = arith.mulf %7, %10 : vector<1x128xf32>
    %12 = arith.mulf %9, %9 : vector<1x128xf32>
    %13 = arith.subf %11, %12 : vector<1x128xf32>
    %cst_7 = arith.constant 0.000000e+00 : f32
    %14 = vector.broadcast %cst_7 : f32 to vector<1x128xf32>
    %15 = arith.maximumf %13, %14 : vector<1x128xf32>
    %c0_8 = arith.constant 0 : index
    %c0_9 = arith.constant 0 : index
    %16 = vector.load %arg2[%c0_8, %c0_9] : memref<1x128xf32, #tpu.memory_space<vmem>>, vector<1x128xf32>
    %cst_10 = arith.constant 9.99999974E-6 : f32
    %17 = vector.broadcast %cst_10 : f32 to vector<1x128xf32>
    %18 = arith.addf %15, %17 : vector<1x128xf32>
    %19 = math.rsqrt %18 : vector<1x128xf32>
    %20 = arith.mulf %16, %19 : vector<1x128xf32>
    %c0_11 = arith.constant 0 : index
    %c0_12 = arith.constant 0 : index
    %21 = vector.load %arg3[%c0_11, %c0_12] : memref<1x128xf32, #tpu.memory_space<vmem>>, vector<1x128xf32>
    %22 = arith.mulf %9, %20 : vector<1x128xf32>
    %23 = arith.subf %21, %22 : vector<1x128xf32>
    %24 = vector.broadcast %20 : vector<1x128xf32> to vector<16x128xf32>
    %25 = arith.mulf %2, %24 : vector<16x128xf32>
    %26 = vector.broadcast %23 : vector<1x128xf32> to vector<16x128xf32>
    %27 = arith.addf %25, %26 : vector<16x128xf32>
    %cst_13 = arith.constant 0.000000e+00 : f32
    %28 = vector.broadcast %cst_13 : f32 to vector<16x128xf32>
    %29 = arith.maximumf %27, %28 : vector<16x128xf32>
    %30 = arith.mulf %29, %29 : vector<16x128xf32>
    %cst_14 = arith.constant dense<0.000000e+00> : vector<16xf32>
    %31 = vector.multi_reduction <add>, %30, %cst_14 [1] : vector<16x128xf32> to vector<16xf32>
    %32 = vector.shape_cast %31 : vector<16xf32> to vector<16x1xf32>
    %cst_15 = arith.constant 1.000000e-24 : f32
    %33 = vector.broadcast %cst_15 : f32 to vector<16x1xf32>
    %34 = arith.maximumf %32, %33 : vector<16x1xf32>
    %35 = math.rsqrt %34 : vector<16x1xf32>
    %36 = vector.broadcast %35 : vector<16x1xf32> to vector<16x128xf32>
    %37 = arith.mulf %29, %36 : vector<16x128xf32>
    %c0_16 = arith.constant 0 : index
    %c0_17 = arith.constant 0 : index
    %38 = vector.load %arg4[%c0_16, %c0_17] : memref<16x128xf32, #tpu.memory_space<vmem>>, vector<16x128xf32>
    tpu.vector_store %arg4[%c0_16, %c0_17], %37 {strides = array<i32>} : memref<16x128xf32, #tpu.memory_space<vmem>>, vector<16x128xf32>,
    return
  }
}

</mosaic_0001>

<llo_original>
// kernel: sure_fc_caltech.1
$region0: #{sure_fc_caltech.1}
  #allocation0 [shape = 'u32[]', space=smem, size = 0x4, offset = 0x4, fixed_abs, tag = 'smem constant byte address 0x4 - core index']
  #allocation1 [shape = 'u32[144,128]{1,0:T(1,128)}', space=vmem, size = 0x12000, scoped, tag = 'internal scratch']
  %s0 = inlined_call_operand.hbm [shape: f32[16,256], index: 0, kind: input, shape index: {}]
  %s1 = inlined_call_operand.hbm [shape: f32[256,128], index: 1, kind: input, shape index: {}]
  %s2 = inlined_call_operand.vmem [shape: f32[1,128], index: 2, kind: input, shape index: {}]
  %s3 = inlined_call_operand.vmem [shape: f32[1,128], index: 3, kind: input, shape index: {}]
  %s4 = inlined_call_operand.hbm [shape: f32[16,128], index: 4, kind: output, shape index: {}]
  %s5 = sld [smem:[#allocation0]]
  $region34: #{sure_fc_caltech.1} parent=0
    _
  %s7 = ssub.s32 1, %s5
  %s8 = scalar_select 0, %s7, %s5
  $region1: #{sure_fc_caltech.1} parent=0
    #allocation2 [shape = 'u8[16384]{0}', space=vmem, size = 0x4000, scoped, tag = 'input window, operand 0, single buffered']
    #allocation3 [shape = 's32[1]{0}', space=sflag, size = 0x4, scoped, tag = 'scoped memory for sure_fc_caltech.1']
    #allocation4 [shape = 's32[1]{0}', space=sflag, size = 0x4, scoped, tag = 'scoped memory for sure_fc_caltech.1']
    #allocation5 [shape = 'u8[131072]{0}', space=vmem, size = 0x20000, scoped, tag = 'input window, operand 1, single buffered']
    #allocation6 [shape = 's32[1]{0}', space=sflag, size = 0x4, scoped, tag = 'scoped memory for sure_fc_caltech.1']
    #allocation7 [shape = 'u8[8192]{0}', space=vmem, size = 0x2000, scoped, tag = 'output window, operand 0, single buffered']
    %9 = vsyncpa [#allocation3], 0
    %10 = vsyncpa [#allocation6], 0
    %11 = vsyncpa [#allocation4], 0
    // Predicated region
    $region2: #{sure_fc_caltech.1} parent=1 // pred_check
      _
    $region3: #{sure_fc_caltech.1} parent=1 // pred_check_branch
      %13 = sbr.rel (0) target = $region5
    $region4: #{sure_fc_caltech.1} parent=1 // pred_region
      %s15 = ssub.s32 512, 512
      %16 = vsyncadd [#allocation3], %s15
      %s17 = sshll.u32 [#allocation2], 4
      %s18 = int_to_ptr.vmem [resolvable:$true] %s17
      %23 = dma.hbm_to_vmem [thread:$0]  %s0, 512, %s18, [#allocation3], 256, 256, 16
    $region5: #{sure_fc_caltech.1} parent=1 // pred_fallthru
      _
    // Predicated region
    $region6: #{sure_fc_caltech.1} parent=1 // pred_check
      _
    $region7: #{sure_fc_caltech.1} parent=1 // pred_check_branch
      %25 = sbr.rel (0) target = $region9
    $region8: #{sure_fc_caltech.1} parent=1 // pred_region
      %s27 = ssub.s32 4096, 4096
      %28 = vsyncadd [#allocation6], %s27
      %s29 = sshll.u32 [#allocation5], 4
      %s30 = int_to_ptr.vmem [resolvable:$true] %s29
      %35 = dma.hbm_to_vmem [thread:$0]  %s1, 4096, %s30, [#allocation6], 128, 128, 8
    $region9: #{sure_fc_caltech.1} parent=1 // pred_fallthru
      _
    // Predicated region
    $region10: #{sure_fc_caltech.1} parent=1 // pred_check
      _
    $region11: #{sure_fc_caltech.1} parent=1 // pred_check_branch
      %37 = sbr.rel (0) target = $region13
    $region12: #{sure_fc_caltech.1} parent=1 // pred_region
      _
    $region13: #{sure_fc_caltech.1} parent=1 // pred_fallthru
      _
    // Predicated region
    $region14: #{sure_fc_caltech.1} parent=1 // pred_check
      _
    $region15: #{sure_fc_caltech.1} parent=1 // pred_check_branch
      %39 = sbr.rel (0) target = $region17
    $region16: #{sure_fc_caltech.1} parent=1 // pred_region
      _
    $region17: #{sure_fc_caltech.1} parent=1 // pred_fallthru
      _
    // Predicated region
    $region18: #{sure_fc_caltech.1} parent=1 // pred_check
      _
    $region19: #{sure_fc_caltech.1} parent=1 // pred_check_branch
      %41 = sbr.rel (0) target = $region21
    $region20: #{sure_fc_caltech.1} parent=1 // pred_region
      %42 = dma.done [#allocation3], 512
    $region21: #{sure_fc_caltech.1} parent=1 // pred_fallthru
      _
    // Predicated region
    $region22: #{sure_fc_caltech.1} parent=1 // pred_check
      _
    $region23: #{sure_fc_caltech.1} parent=1 // pred_check_branch
      %44 = sbr.rel (0) target = $region25
    $region24: #{sure_fc_caltech.1} parent=1 // pred_region
      %45 = dma.done [#allocation6], 4096
    $region25: #{sure_fc_caltech.1} parent=1 // pred_fallthru
      _
    %v46 = vld [vmem:[#allocation2] sm:$0xff]
    %v47 = vld [vmem:[#allocation2 + $0x8] sm:$0xff]
    %v48 = vld [vmem:[#allocation2 + $0x10] sm:$0xff]
    %v49 = vld [vmem:[#allocation2 + $0x18] sm:$0xff]
    %v50 = vld [vmem:[#allocation5] sm:$0xff]
    %v51 = vld [vmem:[#allocation5 + $0x8] sm:$0xff]
    %v52 = vld [vmem:[#allocation5 + $0x10] sm:$0xff]
    %v53 = vld [vmem:[#allocation5 + $0x18] sm:$0xff]
    %v54 = vld [vmem:[#allocation5 + $0x20] sm:$0xff]
    %v55 = vld [vmem:[#allocation5 + $0x28] sm:$0xff]
    %v56 = vld [vmem:[#allocation5 + $0x30] sm:$0xff]
    %v57 = vld [vmem:[#allocation5 + $0x38] sm:$0xff]
    %v58 = vld [vmem:[#allocation5 + $0x40] sm:$0xff]
    %v59 = vld [vmem:[#allocation5 + $0x48] sm:$0xff]
    %v60 = vld [vmem:[#allocation5 + $0x50] sm:$0xff]
    %v61 = vld [vmem:[#allocation5 + $0x58] sm:$0xff]
    %v62 = vld [vmem:[#allocation5 + $0x60] sm:$0xff]
    %v63 = vld [vmem:[#allocation5 + $0x68] sm:$0xff]
    %v64 = vld [vmem:[#allocation5 + $0x70] sm:$0xff]
    %v65 = vld [vmem:[#allocation5 + $0x78] sm:$0xff]
    %v66 = vld [vmem:[#allocation5 + $0x80] sm:$0xff]
    %v67 = vld [vmem:[#allocation5 + $0x88] sm:$0xff]
    %v68 = vld [vmem:[#allocation5 + $0x90] sm:$0xff]
    %v69 = vld [vmem:[#allocation5 + $0x98] sm:$0xff]
    %v70 = vld [vmem:[#allocation5 + $0xa0] sm:$0xff]
    %v71 = vld [vmem:[#allocation5 + $0xa8] sm:$0xff]
    %v72 = vld [vmem:[#allocation5 + $0xb0] sm:$0xff]
    %v73 = vld [vmem:[#allocation5 + $0xb8] sm:$0xff]
    %v74 = vld [vmem:[#allocation5 + $0xc0] sm:$0xff]
    %v75 = vld [vmem:[#allocation5 + $0xc8] sm:$0xff]
    %v76 = vld [vmem:[#allocation5 + $0xd0] sm:$0xff]
    %v77 = vld [vmem:[#allocation5 + $0xd8] sm:$0xff]
    %v78 = vld [vmem:[#allocation5 + $0xe0] sm:$0xff]
    %v79 = vld [vmem:[#allocation5 + $0xe8] sm:$0xff]
    %v80 = vld [vmem:[#allocation5 + $0xf0] sm:$0xff]
    %v81 = vld [vmem:[#allocation5 + $0xf8] sm:$0xff]
    %82 = vmatprep.subr.mxu0 0.0
    %83 = vmatpush1.msra.mxu0 %v50
    %84 = vmatprep.subr.mxu0 0.0
    %85 = vmatpush1.msra.mxu0 %v51
    %86 = vmatprep.subr.mxu0 0.0
    %87 = vmatpush1.msra.mxu0 %v52
    %88 = vmatprep.subr.mxu0 0.0
    %89 = vmatpush1.msra.mxu0 %v53
    %90 = vmatprep.subr.mxu0 0.0
    %91 = vmatpush1.msra.mxu0 %v54
    %92 = vmatprep.subr.mxu0 0.0
    %93 = vmatpush1.msra.mxu0 %v55
    %94 = vmatprep.subr.mxu0 0.0
    %95 = vmatpush1.msra.mxu0 %v56
    %96 = vmatprep.subr.mxu0 0.0
    %97 = vmatpush1.msra.mxu0 %v57
    %98 = vmatprep.subr.mxu0 0.0
    %99 = vmatpush1.msra.mxu0 %v58
    %100 = vmatprep.subr.mxu0 0.0
    %101 = vmatpush1.msra.mxu0 %v59
    %102 = vmatprep.subr.mxu0 0.0
    %103 = vmatpush1.msra.mxu0 %v60
    %104 = vmatprep.subr.mxu0 0.0
    %105 = vmatpush1.msra.mxu0 %v61
    %106 = vmatprep.subr.mxu0 0.0
    %107 = vmatpush1.msra.mxu0 %v62
    %108 = vmatprep.subr.mxu0 0.0
    %109 = vmatpush1.msra.mxu0 %v63
    %110 = vmatprep.subr.mxu0 0.0
    %111 = vmatpush1.msra.mxu0 %v64
    %112 = vmatprep.subr.mxu0 0.0
    %113 = vmatpush1.msra.mxu0 %v65
    %114 = vmatprep.subr.mxu0 0.0
    %115 = vmatpush1.msra.mxu0 %v66
    %116 = vmatprep.subr.mxu0 0.0
    %117 = vmatpush1.msra.mxu0 %v67
    %118 = vmatprep.subr.mxu0 0.0
    %119 = vmatpush1.msra.mxu0 %v68
    %120 = vmatprep.subr.mxu0 0.0
    %121 = vmatpush1.msra.mxu0 %v69
    %122 = vmatprep.subr.mxu0 0.0
    %123 = vmatpush1.msra.mxu0 %v70
    %124 = vmatprep.subr.mxu0 0.0
    %125 = vmatpush1.msra.mxu0 %v71
    %126 = vmatprep.subr.mxu0 0.0
    %127 = vmatpush1.msra.mxu0 %v72
    %128 = vmatprep.subr.mxu0 0.0
    %129 = vmatpush1.msra.mxu0 %v73
    %130 = vmatprep.subr.mxu0 0.0
    %131 = vmatpush1.msra.mxu0 %v74
    %132 = vmatprep.subr.mxu0 0.0
    %133 = vmatpush1.msra.mxu0 %v75
    %134 = vmatprep.subr.mxu0 0.0
    %135 = vmatpush1.msra.mxu0 %v76
    %136 = vmatprep.subr.mxu0 0.0
    %137 = vmatpush1.msra.mxu0 %v77
    %138 = vmatprep.subr.mxu0 0.0
    %139 = vmatpush1.msra.mxu0 %v78
    %140 = vmatprep.subr.mxu0 0.0
    %141 = vmatpush1.msra.mxu0 %v79
    %142 = vmatprep.subr.mxu0 0.0
    %143 = vmatpush1.msra.mxu0 %v80
    %144 = vmatprep.subr.mxu0 0.0
    %145 = vmatpush1.msra.mxu0 %v81
    %146 = vmatprep.mubr.f32.mxu0 %v47
    %147 = vmatmul.mubr.f32.gmra.mrb[0].mxu0 %v46
    %v148 = vpop.f32.mrb[0].mxu0
    %v149 = vadd.f32 0.0, %v148
    %v150 = vpop.f32.mrb[0].mxu0
    %151 = vmatprep.mubr.f32.mxu0 %v49
    %152 = vmatmul.mubr.f32.gmra.mrb[0].mxu0 %v48
    %v153 = vpop.f32.mrb[0].mxu0
    %v154 = vadd.f32 0.0, %v153
    %v155 = vpop.f32.mrb[0].mxu0
    %156 = vdwg.mxu0
    %v157 = vadd.f32 %v149, %v154
    %v158 = vrot.slane %v157, 4
    %v159 = vadd.f32 %v157, %v158
    %v160 = vrot.slane %v159, 2
    %v161 = vadd.f32 %v159, %v160
    %v162 = vrot.slane %v161, 1
    %v163 = vadd.f32 %v161, %v162
    %v164 = vmul.f32 %v149, %v149
    %v165 = vmul.f32 %v154, %v154
    %v166 = vadd.f32 %v164, %v165
    %v167 = vrot.slane %v166, 4
    %v168 = vadd.f32 %v166, %v167
    %v169 = vrot.slane %v168, 2
    %v170 = vadd.f32 %v168, %v169
    %v171 = vrot.slane %v170, 1
    %v172 = vadd.f32 %v170, %v171
    %v173 = vmul.f32 %v163, 0.0625
    %v174 = vmul.f32 %v172, 0.0625
    %v175 = vmul.f32 %v173, %v173
    %v176 = vsub.f32 %v174, %v175
    %v177 = vmax.f32 %v176, 0.0
    %v178 = vld [vmem:[%s2] sm:$0x1]
    %v179 = vadd.f32 %v177, 1e-05
    %v180 = vrsqrt.pop %v179
    %v181 = vmul.f32 %v178, %v180
    %v182 = vld [vmem:[%s3] sm:$0x1]
    %v183 = vmul.f32 %v173, %v181
    %v184 = vsub.f32 %v182, %v183
    %v186 = vlaneseq
    %v187 = vshrl.u32 %v186, 7
    %v188 = vsub.s32 0, %v187
    %v189 = vrot.slane %v181, %v188
    %v191 = vmul.f32 %v149, %v189
    %v192 = vmul.f32 %v154, %v189
    %v194 = vlaneseq
    %v195 = vshrl.u32 %v194, 7
    %v196 = vsub.s32 0, %v195
    %v197 = vrot.slane %v184, %v196
    %v199 = vadd.f32 %v191, %v197
    %v200 = vadd.f32 %v192, %v197
    %v201 = vmax.f32 %v199, 0.0
    %v202 = vmax.f32 %v200, 0.0
    %v203 = vmul.f32 %v201, %v201
    %v204 = vmul.f32 %v202, %v202
    %205 = vadd.xlane.f32.xlu0 %v203
    %v206 = vpop.xlane.xlu0 %205
    %207 = vadd.xlane.f32.xlu0 %v204
    %v208 = vpop.xlane.xlu0 %207
    %v209 = vmax.f32 %v206, 1e-24
    %v210 = vmax.f32 %v208, 1e-24
    %v211 = vrsqrt.pop %v209
    %v212 = vrsqrt.pop %v210
    %v213 = vmul.f32 %v201, %v211
    %v214 = vmul.f32 %v202, %v212
    %215 = vst [vmem:[#allocation7] sm:$0xff] %v213
    %216 = vst [vmem:[#allocation7 + $0x8] sm:$0xff] %v214
    // Predicated region
    $region26: #{sure_fc_caltech.1} parent=1 // pred_check
      _
    $region27: #{sure_fc_caltech.1} parent=1 // pred_check_branch
      %218 = sbr.rel (0) target = $region29
    $region28: #{sure_fc_caltech.1} parent=1 // pred_region
      %s220 = ssub.s32 256, 256
      %221 = vsyncadd [#allocation4], %s220
      %s222 = sshll.u32 [#allocation7], 4
      %s223 = int_to_ptr.vmem [resolvable:$true] %s222
      %228 = dma.vmem_to_hbm [thread:$0]  %s223, 256, %s4, [#allocation4], 128, 128, 8
    $region29: #{sure_fc_caltech.1} parent=1 // pred_fallthru
      _
    // Predicated region
    $region30: #{sure_fc_caltech.1} parent=1 // pred_check
      _
    $region31: #{sure_fc_caltech.1} parent=1 // pred_check_branch
      %230 = sbr.rel (0) target = $region33
    $region32: #{sure_fc_caltech.1} parent=1 // pred_region
      %231 = dma.done [#allocation4], 256
    $region33: #{sure_fc_caltech.1} parent=1 // pred_fallthru
      _
    %232 = vsyncpa [#allocation3], 1
    %233 = vsyncpa [#allocation6], 1
    %234 = vsyncpa [#allocation4], 1

</llo_original>
